<compile_context>
chip_gen: v6e
topology: v6e:2x2x1
jax: 0.10.0
libtpu: 0.0.40
codegen_flags: <defaults>
</compile_context>

<pallas_src>
import functools

import jax
import jax.numpy as jnp
from jax.experimental import pallas as pl
from jax.experimental.pallas import tpu as pltpu

_LANE = 128
_SUBLANE = 8


def _round_up(n, m):
    return ((n + m - 1) // m) * m


def _cdiv(a, b):
    return (a + b - 1) // b


def _make_mlp_kernel(layer1_dtype):
    """Fused MLP body: sigmoid(x@W1+b1) -> sigmoid(.@W2+b2) -> .@W3+b3."""

    def _mlp_kernel(x_ref, w1_ref, b1_ref, w2_ref, b2_ref, w3_ref, b3_ref, o_ref):
        # In-kernel bf16 cast of the activation stream (VPU slot, ~free).
        # x stays f32 in HBM -> no extra wrapper cast pass over x.
        x = x_ref[...].astype(layer1_dtype)

        # hidden_1: (Bt, D) @ (D, 128) + (1, 128); f32 accumulation on the MXU.
        h1 = jnp.dot(x, w1_ref[...], preferred_element_type=jnp.float32) + b1_ref[...]
        h1 = jax.nn.sigmoid(h1)                      # EUP slot

        # hidden_2: (Bt, 128) @ (128, 128) + (1, 128); columns >= 64 of W2/b2
        # are zero padding -> padded h2 lanes are sigmoid(0) = 0.5.
        h2 = jnp.dot(h1, w2_ref[...], preferred_element_type=jnp.float32) + b2_ref[...]
        h2 = jax.nn.sigmoid(h2)

        # output: (Bt, 128) @ (128, 128) + (1, 128); padded h2 lanes multiply
        # all-zero W3 rows, so the real 10 logits are exact. No activation.
        out = jnp.dot(h2, w3_ref[...], preferred_element_type=jnp.float32) + b3_ref[...]

        o_ref[...] = out.astype(o_ref.dtype)         # lane-dense (unmasked) store

    return _mlp_kernel


def prepare_params(params, *, use_bf16=True):
    """One-time weight prep — call once, outside the per-forward path."""
    w1, b1 = params["w1"], params["b1"]
    w2, b2 = params["w2"], params["b2"]
    w3, b3 = params["w3"], params["b3"]

    H1 = w1.shape[1]                                 # 128 (already lane-dense)
    H2 = w2.shape[1]                                 # 64
    O = w3.shape[1]                                  # 10
    H2p = _round_up(max(H2, _LANE), _LANE)           # 128
    Op = _round_up(max(O, _LANE), _LANE)             # 128

    # Zero padding is required for correctness of the lane-dense trick:
    # padded b2/W2 columns and padded W3 rows / b3 columns must be exactly 0.
    w2p = jnp.zeros((H1, H2p), w2.dtype).at[:, :H2].set(w2)
    b2p = jnp.zeros((1, H2p), b2.dtype).at[:, :H2].set(b2)
    w3p = jnp.zeros((H2p, Op), w3.dtype).at[:H2, :O].set(w3)
    b3p = jnp.zeros((1, Op), b3.dtype).at[:, :O].set(b3)

    w1p = w1.astype(jnp.bfloat16) if use_bf16 else w1

    return {"w1": w1p, "b1": b1, "w2": w2p, "b2": b2p, "w3": w3p, "b3": b3p}


@functools.partial(jax.jit, static_argnames=("batch_tile", "use_bf16", "out_features"))
def digit_classifier_forward(x, params, *, batch_tile=4096, use_bf16=True,
                             out_features=10):
    """x: (B, D) float32. params: output of prepare_params()."""
    B, D = x.shape
    w1, b1 = params["w1"], params["b1"]
    w2, b2 = params["w2"], params["b2"]
    w3, b3 = params["w3"], params["b3"]
    H1, H2p, Op = w1.shape[1], w2.shape[1], w3.shape[1]

    # Batch tile: as large as reasonable (bt=4096 -> ~10 MiB VMEM incl. double
    # buffering, well under the 32 MiB scoped default on every generation),
    # clamped to the 8-aligned batch. No divisibility requirement on B.
    bt = max(_SUBLANE, min(int(batch_tile), _round_up(B, _SUBLANE)))
    # v7x megacore: if there is enough work but the whole batch fits one tile,
    # split it so the "parallel" axis has >=2 grid steps (both TCs engage).
    if B >= 512 and _cdiv(B, bt) < 2:
        bt = max(_SUBLANE, _round_up(_cdiv(B, 2), _SUBLANE))
    grid = (_cdiv(B, bt),)
    # A partial edge block (B % bt != 0) is fine: OOB input rows are garbage,
    # rows are independent, and OOB output rows are masked on store.

    layer1_dtype = jnp.bfloat16 if use_bf16 else x.dtype
    out_dtype = jnp.bfloat16 if use_bf16 else jnp.float32

    out = pl.pallas_call(
        _make_mlp_kernel(layer1_dtype),
        out_shape=jax.ShapeDtypeStruct((B, Op), out_dtype),
        grid_spec=pl.GridSpec(
            grid=grid,
            in_specs=[
                pl.BlockSpec((bt, D), lambda i: (i, 0)),     # x tile (streamed)
                pl.BlockSpec((D, H1), lambda i: (0, 0)),     # W1 (resident)
                pl.BlockSpec((1, H1), lambda i: (0, 0)),     # b1
                pl.BlockSpec((H1, H2p), lambda i: (0, 0)),   # W2 (lane-padded)
                pl.BlockSpec((1, H2p), lambda i: (0, 0)),    # b2
                pl.BlockSpec((H2p, Op), lambda i: (0, 0)),   # W3 (lane-padded)
                pl.BlockSpec((1, Op), lambda i: (0, 0)),     # b3 (lane-padded)
            ],
            out_specs=pl.BlockSpec((bt, Op), lambda i: (i, 0)),
        ),
        compiler_params=pltpu.CompilerParams(
            dimension_semantics=("parallel",),  # batch axis shards across TCs
        ),
    )(x, w1, b1, w2, b2, w3, b3)

    # Slice off lane padding; upcast fuses with the slice under jit.
    return out[:, :out_features].astype(jnp.float32)


def init_params(key, input_size):
    """Deterministic init mimicking nn.Linear's U(-1/sqrt(in), 1/sqrt(in))."""
    dims = [(input_size, 128), (128, 64), (64, 10)]
    params = {}
    for idx, (fan_in, fan_out) in enumerate(dims, start=1):
        key, kw, kb = jax.random.split(key, 3)
        bound = 1.0 / jnp.sqrt(jnp.float32(fan_in))
        params[f"w{idx}"] = jax.random.uniform(
            kw, (fan_in, fan_out), jnp.float32, minval=-bound, maxval=bound)
        params[f"b{idx}"] = jax.random.uniform(
            kb, (1, fan_out), jnp.float32, minval=-bound, maxval=bound)
    return params


def reference_forward(x, params):
    h1 = jax.nn.sigmoid(x @ params["w1"] + params["b1"])
    h2 = jax.nn.sigmoid(h1 @ params["w2"] + params["b2"])
    return h2 @ params["w3"] + params["b3"]


if __name__ == "__main__":
    key = jax.random.PRNGKey(0)
    input_size = 256   # small synthetic "flattened digit image" size
    batch = 40         # not a multiple of 128 -> exercises the tile clamping

    key, kx, kp = jax.random.split(key, 3)
    x = jax.random.normal(kx, (batch, input_size), jnp.float32)
    raw_params = init_params(kp, input_size)

    ref = reference_forward(x, raw_params)

    # Full-f32 path: strict check against the reference.
    params_f32 = prepare_params(raw_params, use_bf16=False)
    out_f32 = jax.block_until_ready(
        digit_classifier_forward(x, params_f32, use_bf16=False))
    assert out_f32.shape == (batch, 10)
    assert jnp.allclose(out_f32, ref, atol=1e-4, rtol=1e-4), "f32 mismatch vs reference"

    # bf16 activation-stream + bf16 store path (perf default): looser tolerance.
    params_bf16 = prepare_params(raw_params, use_bf16=True)
    out_bf16 = jax.block_until_ready(
        digit_classifier_forward(x, params_bf16, use_bf16=True))
    assert out_bf16.shape == (batch, 10)
    assert jnp.allclose(out_bf16, ref, atol=2e-2, rtol=2e-2), "bf16 mismatch vs reference"

    print("KERNEL_OK")
</pallas_src>

<mosaic_0001>
module attributes {stable_mosaic.version = 11 : i64} {
  func.func @_mlp_kernel(%arg0: i32, %arg1: memref<40x256xf32, #tpu.memory_space<vmem>>, %arg2: memref<256x128xf32, #tpu.memory_space<vmem>>, %arg3: memref<1x128xf32, #tpu.memory_space<vmem>>, %arg4: memref<128x128xf32, #tpu.memory_space<vmem>>, %arg5: memref<1x128xf32, #tpu.memory_space<vmem>>, %arg6: memref<128x128xf32, #tpu.memory_space<vmem>>, %arg7: memref<1x128xf32, #tpu.memory_space<vmem>>, %arg8: memref<40x128xf32, #tpu.memory_space<vmem>>) attributes {dimension_semantics = [#tpu.dimension_semantics<parallel>], iteration_bounds = array<i64: 1>, scalar_prefetch = 0 : i64, scratch_operands = 0 : i64, tpu.core_type = #tpu.core_type<tc>, window_params = [{transform_indices = @transform_0, window_bounds = array<i64: 40, 256>}, {pipeline_mode = #tpu.pipeline_mode<synchronous>, transform_indices = @transform_1, window_bounds = array<i64: 256, 128>}, {pipeline_mode = #tpu.pipeline_mode<synchronous>, transform_indices = @transform_2, window_bounds = array<i64: 1, 128>}, {pipeline_mode = #tpu.pipeline_mode<synchronous>, transform_indices = @transform_3, window_bounds = array<i64: 128, 128>}, {pipeline_mode = #tpu.pipeline_mode<synchronous>, transform_indices = @transform_4, window_bounds = array<i64: 1, 128>}, {pipeline_mode = #tpu.pipeline_mode<synchronous>, transform_indices = @transform_5, window_bounds = array<i64: 128, 128>}, {pipeline_mode = #tpu.pipeline_mode<synchronous>, transform_indices = @transform_6, window_bounds = array<i64: 1, 128>}, {transform_indices = @transform_7, window_bounds = array<i64: 40, 128>}]} {
    %c0 = arith.constant 0 : index
    %c0_0 = arith.constant 0 : index
    %0 = vector.load %arg1[%c0, %c0_0] : memref<40x256xf32, #tpu.memory_space<vmem>>, vector<40x256xf32>
    %c0_1 = arith.constant 0 : index
    %c0_2 = arith.constant 0 : index
    %1 = vector.load %arg2[%c0_1, %c0_2] : memref<256x128xf32, #tpu.memory_space<vmem>>, vector<256x128xf32>
    %cst = arith.constant dense<0.000000e+00> : vector<40x128xf32>
    %2 = tpu.matmul %0, %1, %cst {dimension_numbers = #tpu.dot_dimension_numbers<[1], [0], [0], [1], [0, 0, 1, 1], [], []>} : vector<40x256xf32>, vector<256x128xf32>, vector<40x128xf32> -> vector<40x128xf32>
    %c0_3 = arith.constant 0 : index
    %c0_4 = arith.constant 0 : index
    %3 = vector.load %arg3[%c0_3, %c0_4] : memref<1x128xf32, #tpu.memory_space<vmem>>, vector<1x128xf32>
    %4 = vector.broadcast %3 : vector<1x128xf32> to vector<40x128xf32>
    %5 = arith.addf %2, %4 : vector<40x128xf32>
    %6 = arith.negf %5 : vector<40x128xf32>
    %7 = math.exp %6 : vector<40x128xf32>
    %cst_5 = arith.constant 1.000000e+00 : f32
    %8 = vector.broadcast %cst_5 : f32 to vector<40x128xf32>
    %9 = arith.addf %8, %7 : vector<40x128xf32>
    %10 = arith.divf %8, %9 : vector<40x128xf32>
    %c0_6 = arith.constant 0 : index
    %c0_7 = arith.constant 0 : index
    %11 = vector.load %arg4[%c0_6, %c0_7] : memref<128x128xf32, #tpu.memory_space<vmem>>, vector<128x128xf32>
    %cst_8 = arith.constant dense<0.000000e+00> : vector<40x128xf32>
    %12 = tpu.matmul %10, %11, %cst_8 {dimension_numbers = #tpu.dot_dimension_numbers<[1], [0], [0], [1], [0, 0, 1, 1], [], []>} : vector<40x128xf32>, vector<128x128xf32>, vector<40x128xf32> -> vector<40x128xf32>
    %c0_9 = arith.constant 0 : index
    %c0_10 = arith.constant 0 : index
    %13 = vector.load %arg5[%c0_9, %c0_10] : memref<1x128xf32, #tpu.memory_space<vmem>>, vector<1x128xf32>
    %14 = vector.broadcast %13 : vector<1x128xf32> to vector<40x128xf32>
    %15 = arith.addf %12, %14 : vector<40x128xf32>
    %16 = arith.negf %15 : vector<40x128xf32>
    %17 = math.exp %16 : vector<40x128xf32>
    %cst_11 = arith.constant 1.000000e+00 : f32
    %18 = vector.broadcast %cst_11 : f32 to vector<40x128xf32>
    %19 = arith.addf %18, %17 : vector<40x128xf32>
    %20 = arith.divf %18, %19 : vector<40x128xf32>
    %c0_12 = arith.constant 0 : index
    %c0_13 = arith.constant 0 : index
    %21 = vector.load %arg6[%c0_12, %c0_13] : memref<128x128xf32, #tpu.memory_space<vmem>>, vector<128x128xf32>
    %cst_14 = arith.constant dense<0.000000e+00> : vector<40x128xf32>
    %22 = tpu.matmul %20, %21, %cst_14 {dimension_numbers = #tpu.dot_dimension_numbers<[1], [0], [0], [1], [0, 0, 1, 1], [], []>} : vector<40x128xf32>, vector<128x128xf32>, vector<40x128xf32> -> vector<40x128xf32>
    %c0_15 = arith.constant 0 : index
    %c0_16 = arith.constant 0 : index
    %23 = vector.load %arg7[%c0_15, %c0_16] : memref<1x128xf32, #tpu.memory_space<vmem>>, vector<1x128xf32>
    %24 = vector.broadcast %23 : vector<1x128xf32> to vector<40x128xf32>
    %25 = arith.addf %22, %24 : vector<40x128xf32>
    %c0_17 = arith.constant 0 : index
    %c0_18 = arith.constant 0 : index
    %26 = vector.load %arg8[%c0_17, %c0_18] : memref<40x128xf32, #tpu.memory_space<vmem>>, vector<40x128xf32>
    tpu.vector_store %arg8[%c0_17, %c0_18], %25 {strides = array<i32>} : memref<40x128xf32, #tpu.memory_space<vmem>>, vector<40x128xf32>,
    return
  }
  func.func @transform_0(%arg0: i32) -> (i32, i32) {
    %c0_i32 = arith.constant 0 : i32
    %c0_i32_0 = arith.constant 0 : i32
    return %arg0, %c0_i32 : i32, i32
  }
  func.func @transform_1(%arg0: i32) -> (i32, i32) {
    %c0_i32 = arith.constant 0 : i32
    %c0_i32_0 = arith.constant 0 : i32
    %c0_i32_1 = arith.constant 0 : i32
    return %c0_i32, %c0_i32_0 : i32, i32
  }
  func.func @transform_2(%arg0: i32) -> (i32, i32) {
    %c0_i32 = arith.constant 0 : i32
    %c0_i32_0 = arith.constant 0 : i32
    %c0_i32_1 = arith.constant 0 : i32
    return %c0_i32, %c0_i32_0 : i32, i32
  }
  func.func @transform_3(%arg0: i32) -> (i32, i32) {
    %c0_i32 = arith.constant 0 : i32
    %c0_i32_0 = arith.constant 0 : i32
    %c0_i32_1 = arith.constant 0 : i32
    return %c0_i32, %c0_i32_0 : i32, i32
  }
  func.func @transform_4(%arg0: i32) -> (i32, i32) {
    %c0_i32 = arith.constant 0 : i32
    %c0_i32_0 = arith.constant 0 : i32
    %c0_i32_1 = arith.constant 0 : i32
    return %c0_i32, %c0_i32_0 : i32, i32
  }
  func.func @transform_5(%arg0: i32) -> (i32, i32) {
    %c0_i32 = arith.constant 0 : i32
    %c0_i32_0 = arith.constant 0 : i32
    %c0_i32_1 = arith.constant 0 : i32
    return %c0_i32, %c0_i32_0 : i32, i32
  }
  func.func @transform_6(%arg0: i32) -> (i32, i32) {
    %c0_i32 = arith.constant 0 : i32
    %c0_i32_0 = arith.constant 0 : i32
    %c0_i32_1 = arith.constant 0 : i32
    return %c0_i32, %c0_i32_0 : i32, i32
  }
  func.func @transform_7(%arg0: i32) -> (i32, i32) {
    %c0_i32 = arith.constant 0 : i32
    %c0_i32_0 = arith.constant 0 : i32
    return %arg0, %c0_i32 : i32, i32
  }
}

</mosaic_0001>

<llo_original>
// kernel: digit_classifier_forward.1
$region0: #{digit_classifier_forward.1}
  #allocation0 [shape = 'u32[]', space=smem, size = 0x4, offset = 0x4, fixed_abs, tag = 'smem constant byte address 0x4 - core index']
  #allocation1 [shape = 'u32[144,128]{1,0:T(1,128)}', space=vmem, size = 0x12000, scoped, tag = 'internal scratch']
  %s0 = inlined_call_operand.hbm [shape: f32[40,256], index: 0, kind: input, shape index: {}]
  %s1 = inlined_call_operand.hbm [shape: f32[256,128], index: 1, kind: input, shape index: {}]
  %s2 = inlined_call_operand.vmem [shape: f32[1,128], index: 2, kind: input, shape index: {}]
  %s3 = inlined_call_operand.hbm [shape: f32[128,128], index: 3, kind: input, shape index: {}]
  %s4 = inlined_call_operand.vmem [shape: f32[1,128], index: 4, kind: input, shape index: {}]
  %s5 = inlined_call_operand.hbm [shape: f32[128,128], index: 5, kind: input, shape index: {}]
  %s6 = inlined_call_operand.vmem [shape: f32[1,128], index: 6, kind: input, shape index: {}]
  %s7 = inlined_call_operand.vmem [shape: f32[40,128], index: 7, kind: output, shape index: {}]
  %s8 = sld [smem:[#allocation0]]
  $region54: #{digit_classifier_forward.1} parent=0
    _
  %s10 = ssub.s32 1, %s8
  %s11 = scalar_select 0, %s10, %s8
  $region1: #{digit_classifier_forward.1} parent=0
    #allocation2 [shape = 'u8[40960]{0}', space=vmem, size = 0xa000, scoped, tag = 'input window, operand 0, single buffered']
    #allocation3 [shape = 's32[1]{0}', space=sflag, size = 0x4, scoped, tag = 'scoped memory for digit_classifier_forward.1']
    #allocation4 [shape = 'u8[131072]{0}', space=vmem, size = 0x20000, scoped, tag = 'input window, operand 1, single buffered']
    #allocation5 [shape = 's32[1]{0}', space=sflag, size = 0x4, scoped, tag = 'scoped memory for digit_classifier_forward.1']
    #allocation6 [shape = 'u8[65536]{0}', space=vmem, size = 0x10000, scoped, tag = 'input window, operand 3, single buffered']
    #allocation7 [shape = 'u8[65536]{0}', space=vmem, size = 0x10000, scoped, tag = 'input window, operand 5, single buffered']
    #allocation8 [shape = 's32[1]{0}', space=sflag, size = 0x4, scoped, tag = 'scoped memory for digit_classifier_forward.1']
    %12 = vsyncpa [#allocation3], 0
    %13 = vsyncpa [#allocation5], 0
    %14 = vsyncpa [#allocation8], 0
    // Predicated region
    $region2: #{digit_classifier_forward.1} parent=1 // pred_check
      _
    $region3: #{digit_classifier_forward.1} parent=1 // pred_check_branch
      %16 = sbr.rel (0) target = $region5
    $region4: #{digit_classifier_forward.1} parent=1 // pred_region
      %s18 = ssub.s32 1280, 1280
      %19 = vsyncadd [#allocation3], %s18
      %s20 = sshll.u32 [#allocation2], 4
      %s21 = int_to_ptr.vmem [resolvable:$true] %s20
      %26 = dma.hbm_to_vmem [thread:$0]  %s0, 1280, %s21, [#allocation3], 256, 256, 16
    $region5: #{digit_classifier_forward.1} parent=1 // pred_fallthru
      _
    // Predicated region
    $region6: #{digit_classifier_forward.1} parent=1 // pred_check
      _
    $region7: #{digit_classifier_forward.1} parent=1 // pred_check_branch
      %28 = sbr.rel (0) target = $region9
    $region8: #{digit_classifier_forward.1} parent=1 // pred_region
      %s30 = ssub.s32 4096, 4096
      %31 = vsyncadd [#allocation5], %s30
      %s32 = sshll.u32 [#allocation4], 4
      %s33 = int_to_ptr.vmem [resolvable:$true] %s32
      %38 = dma.hbm_to_vmem [thread:$0]  %s1, 4096, %s33, [#allocation5], 128, 128, 8
    $region9: #{digit_classifier_forward.1} parent=1 // pred_fallthru
      _
    // Predicated region
    $region10: #{digit_classifier_forward.1} parent=1 // pred_check
      _
    $region11: #{digit_classifier_forward.1} parent=1 // pred_check_branch
      %40 = sbr.rel (0) target = $region13
    $region12: #{digit_classifier_forward.1} parent=1 // pred_region
      _
    $region13: #{digit_classifier_forward.1} parent=1 // pred_fallthru
      _
    // Predicated region
    $region14: #{digit_classifier_forward.1} parent=1 // pred_check
      _
    $region15: #{digit_classifier_forward.1} parent=1 // pred_check_branch
      %42 = sbr.rel (0) target = $region17
    $region16: #{digit_classifier_forward.1} parent=1 // pred_region
      %s44 = ssub.s32 2048, 2048
      %45 = vsyncadd [#allocation5], %s44
      %s46 = sshll.u32 [#allocation6], 4
      %s47 = int_to_ptr.vmem [resolvable:$true] %s46
      %52 = dma.hbm_to_vmem [thread:$0]  %s3, 2048, %s47, [#allocation5], 128, 128, 8
    $region17: #{digit_classifier_forward.1} parent=1 // pred_fallthru
      _
    // Predicated region
    $region18: #{digit_classifier_forward.1} parent=1 // pred_check
      _
    $region19: #{digit_classifier_forward.1} parent=1 // pred_check_branch
      %54 = sbr.rel (0) target = $region21
    $region20: #{digit_classifier_forward.1} parent=1 // pred_region
      _
    $region21: #{digit_classifier_forward.1} parent=1 // pred_fallthru
      _
    // Predicated region
    $region22: #{digit_classifier_forward.1} parent=1 // pred_check
      _
    $region23: #{digit_classifier_forward.1} parent=1 // pred_check_branch
      %56 = sbr.rel (0) target = $region25
    $region24: #{digit_classifier_forward.1} parent=1 // pred_region
      %s58 = ssub.s32 2048, 2048
      %59 = vsyncadd [#allocation8], %s58
      %s60 = sshll.u32 [#allocation7], 4
      %s61 = int_to_ptr.vmem [resolvable:$true] %s60
      %66 = dma.hbm_to_vmem [thread:$0]  %s5, 2048, %s61, [#allocation8], 128, 128, 8
    $region25: #{digit_classifier_forward.1} parent=1 // pred_fallthru
      _
    // Predicated region
    $region26: #{digit_classifier_forward.1} parent=1 // pred_check
      _
    $region27: #{digit_classifier_forward.1} parent=1 // pred_check_branch
      %68 = sbr.rel (0) target = $region29
    $region28: #{digit_classifier_forward.1} parent=1 // pred_region
      _
    $region29: #{digit_classifier_forward.1} parent=1 // pred_fallthru
      _
    // Predicated region
    $region30: #{digit_classifier_forward.1} parent=1 // pred_check
      _
    $region31: #{digit_classifier_forward.1} parent=1 // pred_check_branch
      %70 = sbr.rel (0) target = $region33
    $region32: #{digit_classifier_forward.1} parent=1 // pred_region
      %71 = dma.done [#allocation3], 1280
    $region33: #{digit_classifier_forward.1} parent=1 // pred_fallthru
      _
    // Predicated region
    $region34: #{digit_classifier_forward.1} parent=1 // pred_check
      _
    $region35: #{digit_classifier_forward.1} parent=1 // pred_check_branch
      %73 = sbr.rel (0) target = $region37
    $region36: #{digit_classifier_forward.1} parent=1 // pred_region
      %74 = dma.done [#allocation5], 4096
    $region37: #{digit_classifier_forward.1} parent=1 // pred_fallthru
      _
    // Predicated region
    $region38: #{digit_classifier_forward.1} parent=1 // pred_check
      _
    $region39: #{digit_classifier_forward.1} parent=1 // pred_check_branch
      %76 = sbr.rel (0) target = $region41
    $region40: #{digit_classifier_forward.1} parent=1 // pred_region
      %77 = dma.done [#allocation5], 2048
    $region41: #{digit_classifier_forward.1} parent=1 // pred_fallthru
      _
    // Predicated region
    $region42: #{digit_classifier_forward.1} parent=1 // pred_check
      _
    $region43: #{digit_classifier_forward.1} parent=1 // pred_check_branch
      %79 = sbr.rel (0) target = $region45
    $region44: #{digit_classifier_forward.1} parent=1 // pred_region
      %80 = dma.done [#allocation8], 2048
    $region45: #{digit_classifier_forward.1} parent=1 // pred_fallthru
      _
    %v81 = vld [vmem:[#allocation2] sm:$0xff]
    %v82 = vld [vmem:[#allocation2 + $0x8] sm:$0xff]
    %v83 = vld [vmem:[#allocation2 + $0x10] sm:$0xff]
    %v84 = vld [vmem:[#allocation2 + $0x18] sm:$0xff]
    %v85 = vld [vmem:[#allocation2 + $0x20] sm:$0xff]
    %v86 = vld [vmem:[#allocation2 + $0x28] sm:$0xff]
    %v87 = vld [vmem:[#allocation2 + $0x30] sm:$0xff]
    %v88 = vld [vmem:[#allocation2 + $0x38] sm:$0xff]
    %v89 = vld [vmem:[#allocation2 + $0x40] sm:$0xff]
    %v90 = vld [vmem:[#allocation2 + $0x48] sm:$0xff]
    %v91 = vld [vmem:[#allocation4] sm:$0xff]
    %v92 = vld [vmem:[#allocation4 + $0x8] sm:$0xff]
    %v93 = vld [vmem:[#allocation4 + $0x10] sm:$0xff]
    %v94 = vld [vmem:[#allocation4 + $0x18] sm:$0xff]
    %v95 = vld [vmem:[#allocation4 + $0x20] sm:$0xff]
    %v96 = vld [vmem:[#allocation4 + $0x28] sm:$0xff]
    %v97 = vld [vmem:[#allocation4 + $0x30] sm:$0xff]
    %v98 = vld [vmem:[#allocation4 + $0x38] sm:$0xff]
    %v99 = vld [vmem:[#allocation4 + $0x40] sm:$0xff]
    %v100 = vld [vmem:[#allocation4 + $0x48] sm:$0xff]
    %v101 = vld [vmem:[#allocation4 + $0x50] sm:$0xff]
    %v102 = vld [vmem:[#allocation4 + $0x58] sm:$0xff]
    %v103 = vld [vmem:[#allocation4 + $0x60] sm:$0xff]
    %v104 = vld [vmem:[#allocation4 + $0x68] sm:$0xff]
    %v105 = vld [vmem:[#allocation4 + $0x70] sm:$0xff]
    %v106 = vld [vmem:[#allocation4 + $0x78] sm:$0xff]
    %v107 = vld [vmem:[#allocation4 + $0x80] sm:$0xff]
    %v108 = vld [vmem:[#allocation4 + $0x88] sm:$0xff]
    %v109 = vld [vmem:[#allocation4 + $0x90] sm:$0xff]
    %v110 = vld [vmem:[#allocation4 + $0x98] sm:$0xff]
    %v111 = vld [vmem:[#allocation4 + $0xa0] sm:$0xff]
    %v112 = vld [vmem:[#allocation4 + $0xa8] sm:$0xff]
    %v113 = vld [vmem:[#allocation4 + $0xb0] sm:$0xff]
    %v114 = vld [vmem:[#allocation4 + $0xb8] sm:$0xff]
    %v115 = vld [vmem:[#allocation4 + $0xc0] sm:$0xff]
    %v116 = vld [vmem:[#allocation4 + $0xc8] sm:$0xff]
    %v117 = vld [vmem:[#allocation4 + $0xd0] sm:$0xff]
    %v118 = vld [vmem:[#allocation4 + $0xd8] sm:$0xff]
    %v119 = vld [vmem:[#allocation4 + $0xe0] sm:$0xff]
    %v120 = vld [vmem:[#allocation4 + $0xe8] sm:$0xff]
    %v121 = vld [vmem:[#allocation4 + $0xf0] sm:$0xff]
    %v122 = vld [vmem:[#allocation4 + $0xf8] sm:$0xff]
    %v123 = vld [vmem:[%s2] sm:$0x1]
    %v125 = vlaneseq
    %v126 = vshrl.u32 %v125, 7
    %v127 = vsub.s32 0, %v126
    %v128 = vrot.slane %v123, %v127
    %130 = vmatprep.subr.mxu0 0.0
    %131 = vmatpush1.msra.mxu0 %v106
    %132 = vmatprep.subr.mxu0 0.0
    %133 = vmatpush1.msra.mxu0 %v105
    %134 = vmatprep.subr.mxu0 0.0
    %135 = vmatpush1.msra.mxu0 %v104
    %136 = vmatprep.subr.mxu0 0.0
    %137 = vmatpush1.msra.mxu0 %v103
    %138 = vmatprep.subr.mxu0 0.0
    %139 = vmatpush1.msra.mxu0 %v102
    %140 = vmatprep.subr.mxu0 0.0
    %141 = vmatpush1.msra.mxu0 %v101
    %142 = vmatprep.subr.mxu0 0.0
    %143 = vmatpush1.msra.mxu0 %v100
    %144 = vmatprep.subr.mxu0 0.0
    %145 = vmatpush1.msra.mxu0 %v99
    %146 = vmatprep.subr.mxu0 0.0
    %147 = vmatpush1.msra.mxu0 %v98
    %148 = vmatprep.subr.mxu0 0.0
    %149 = vmatpush1.msra.mxu0 %v97
    %150 = vmatprep.subr.mxu0 0.0
    %151 = vmatpush1.msra.mxu0 %v96
    %152 = vmatprep.subr.mxu0 0.0
    %153 = vmatpush1.msra.mxu0 %v95
    %154 = vmatprep.subr.mxu0 0.0
    %155 = vmatpush1.msra.mxu0 %v94
    %156 = vmatprep.subr.mxu0 0.0
    %157 = vmatpush1.msra.mxu0 %v93
    %158 = vmatprep.subr.mxu0 0.0
    %159 = vmatpush1.msra.mxu0 %v92
    %160 = vmatprep.subr.mxu0 0.0
    %161 = vmatpush1.msra.mxu0 %v91
    %162 = vmatprep.subr.mxu0 0.0
    %163 = vmatpush2.msra.mxu0 %v122
    %164 = vmatprep.subr.mxu0 0.0
    %165 = vmatpush2.msra.mxu0 %v121
    %166 = vmatprep.subr.mxu0 0.0
    %167 = vmatpush2.msra.mxu0 %v120
    %168 = vmatprep.subr.mxu0 0.0
    %169 = vmatpush2.msra.mxu0 %v119
    %170 = vmatprep.subr.mxu0 0.0
    %171 = vmatpush2.msra.mxu0 %v118
    %172 = vmatprep.subr.mxu0 0.0
    %173 = vmatpush2.msra.mxu0 %v117
    %174 = vmatprep.subr.mxu0 0.0
    %175 = vmatpush2.msra.mxu0 %v116
    %176 = vmatprep.subr.mxu0 0.0
    %177 = vmatpush2.msra.mxu0 %v115
    %178 = vmatprep.subr.mxu0 0.0
    %179 = vmatpush2.msra.mxu0 %v114
    %180 = vmatprep.subr.mxu0 0.0
    %181 = vmatpush2.msra.mxu0 %v113
    %182 = vmatprep.subr.mxu0 0.0
    %183 = vmatpush2.msra.mxu0 %v112
    %184 = vmatprep.subr.mxu0 0.0
    %185 = vmatpush2.msra.mxu0 %v111
    %186 = vmatprep.subr.mxu0 0.0
    %187 = vmatpush2.msra.mxu0 %v110
    %188 = vmatprep.subr.mxu0 0.0
    %189 = vmatpush2.msra.mxu0 %v109
    %190 = vmatprep.subr.mxu0 0.0
    %191 = vmatpush2.msra.mxu0 %v108
    %192 = vmatprep.subr.mxu0 0.0
    %193 = vmatpush2.msra.mxu0 %v107
    %194 = vmatprep.mubr.f32.mxu0 %v82
    %195 = vmatmul.mubr.f32.gmra.mxu0 %v81
    %v196 = vpop.f32.mrf.mxu0
    %v197 = vadd.f32 %v128, %v196
    %v198 = vpop.f32.mrf.mxu0
    %199 = vmatprep.mubr.f32.mxu0 %v84
    %200 = vmatmul.mubr.f32.gmra.mxu0 %v83
    %v201 = vpop.f32.mrf.mxu0
    %v202 = vadd.f32 %v128, %v201
    %v203 = vpop.f32.mrf.mxu0
    %204 = vmatprep.mubr.f32.mxu0 %v86
    %205 = vmatmul.mubr.f32.gmra.mxu0 %v85
    %v206 = vpop.f32.mrf.mxu0
    %v207 = vadd.f32 %v128, %v206
    %v208 = vpop.f32.mrf.mxu0
    %209 = vmatprep.mubr.f32.mxu0 %v88
    %210 = vmatmul.mubr.f32.gmra.mxu0 %v87
    %v211 = vpop.f32.mrf.mxu0
    %v212 = vadd.f32 %v128, %v211
    %v213 = vpop.f32.mrf.mxu0
    %214 = vmatprep.mubr.f32.mxu0 %v90
    %215 = vmatmul.mubr.f32.gmra.mxu0 %v89
    %v216 = vpop.f32.mrf.mxu0
    %v217 = vadd.f32 %v128, %v216
    %v218 = vpop.f32.mrf.mxu0
    %219 = vdwg.mxu0
    %v220 = vxor.u32 %v197, 2147483648
    %v221 = vxor.u32 %v202, 2147483648
    %v222 = vxor.u32 %v207, 2147483648
    %v223 = vxor.u32 %v212, 2147483648
    %v224 = vxor.u32 %v217, 2147483648
    %v225 = vmul.f32 %v220, 1.442695
    %v226 = vpow.pop %v225
    %v227 = vmul.f32 %v221, 1.442695
    %v228 = vpow.pop %v227
    %v229 = vmul.f32 %v222, 1.442695
    %v230 = vpow.pop %v229
    %v231 = vmul.f32 %v223, 1.442695
    %v232 = vpow.pop %v231
    %v233 = vmul.f32 %v224, 1.442695
    %v234 = vpow.pop %v233
    %v235 = vadd.f32 %v226, 1.0
    %v236 = vadd.f32 %v228, 1.0
    %v237 = vadd.f32 %v230, 1.0
    %v238 = vadd.f32 %v232, 1.0
    %v239 = vadd.f32 %v234, 1.0
    %v240 = vrcp.pop %v235
    %v241 = vmul.f32 1.0, %v240
    %v242 = vrcp.pop %v236
    %v243 = vmul.f32 1.0, %v242
    %v244 = vrcp.pop %v237
    %v245 = vmul.f32 1.0, %v244
    %v246 = vrcp.pop %v238
    %v247 = vmul.f32 1.0, %v246
    %v248 = vrcp.pop %v239
    %v249 = vmul.f32 1.0, %v248
    %v250 = vld [vmem:[#allocation6] sm:$0xff]
    %v251 = vld [vmem:[#allocation6 + $0x8] sm:$0xff]
    %v252 = vld [vmem:[#allocation6 + $0x10] sm:$0xff]
    %v253 = vld [vmem:[#allocation6 + $0x18] sm:$0xff]
    %v254 = vld [vmem:[#allocation6 + $0x20] sm:$0xff]
    %v255 = vld [vmem:[#allocation6 + $0x28] sm:$0xff]
    %v256 = vld [vmem:[#allocation6 + $0x30] sm:$0xff]
    %v257 = vld [vmem:[#allocation6 + $0x38] sm:$0xff]
    %v258 = vld [vmem:[#allocation6 + $0x40] sm:$0xff]
    %v259 = vld [vmem:[#allocation6 + $0x48] sm:$0xff]
    %v260 = vld [vmem:[#allocation6 + $0x50] sm:$0xff]
    %v261 = vld [vmem:[#allocation6 + $0x58] sm:$0xff]
    %v262 = vld [vmem:[#allocation6 + $0x60] sm:$0xff]
    %v263 = vld [vmem:[#allocation6 + $0x68] sm:$0xff]
    %v264 = vld [vmem:[#allocation6 + $0x70] sm:$0xff]
    %v265 = vld [vmem:[#allocation6 + $0x78] sm:$0xff]
    %v266 = vld [vmem:[%s4] sm:$0x1]
    %v268 = vlaneseq
    %v269 = vshrl.u32 %v268, 7
    %v270 = vsub.s32 0, %v269
    %v271 = vrot.slane %v266, %v270
    %273 = vmatprep.subr.mxu0 0.0
    %274 = vmatpush1.msra.mxu0 %v265
    %275 = vmatprep.subr.mxu0 0.0
    %276 = vmatpush1.msra.mxu0 %v264
    %277 = vmatprep.subr.mxu0 0.0
    %278 = vmatpush1.msra.mxu0 %v263
    %279 = vmatprep.subr.mxu0 0.0
    %280 = vmatpush1.msra.mxu0 %v262
    %281 = vmatprep.subr.mxu0 0.0
    %282 = vmatpush1.msra.mxu0 %v261
    %283 = vmatprep.subr.mxu0 0.0
    %284 = vmatpush1.msra.mxu0 %v260
    %285 = vmatprep.subr.mxu0 0.0
    %286 = vmatpush1.msra.mxu0 %v259
    %287 = vmatprep.subr.mxu0 0.0
    %288 = vmatpush1.msra.mxu0 %v258
    %289 = vmatprep.subr.mxu0 0.0
    %290 = vmatpush1.msra.mxu0 %v257
    %291 = vmatprep.subr.mxu0 0.0
    %292 = vmatpush1.msra.mxu0 %v256
    %293 = vmatprep.subr.mxu0 0.0
    %294 = vmatpush1.msra.mxu0 %v255
    %295 = vmatprep.subr.mxu0 0.0
    %296 = vmatpush1.msra.mxu0 %v254
    %297 = vmatprep.subr.mxu0 0.0
    %298 = vmatpush1.msra.mxu0 %v253
    %299 = vmatprep.subr.mxu0 0.0
    %300 = vmatpush1.msra.mxu0 %v252
    %301 = vmatprep.subr.mxu0 0.0
    %302 = vmatpush1.msra.mxu0 %v251
    %303 = vmatprep.subr.mxu0 0.0
    %304 = vmatpush1.msra.mxu0 %v250
    %305 = vmatprep.subr.mxu0 0.0
    %306 = vmatpush2.msra.mxu0 0.0
    %307 = vmatprep.subr.mxu0 0.0
    %308 = vmatpush2.msra.mxu0 0.0
    %309 = vmatprep.subr.mxu0 0.0
    %310 = vmatpush2.msra.mxu0 0.0
    %311 = vmatprep.subr.mxu0 0.0
    %312 = vmatpush2.msra.mxu0 0.0
    %313 = vmatprep.subr.mxu0 0.0
    %314 = vmatpush2.msra.mxu0 0.0
    %315 = vmatprep.subr.mxu0 0.0
    %316 = vmatpush2.msra.mxu0 0.0
    %317 = vmatprep.subr.mxu0 0.0
    %318 = vmatpush2.msra.mxu0 0.0
    %319 = vmatprep.subr.mxu0 0.0
    %320 = vmatpush2.msra.mxu0 0.0
    %321 = vmatprep.subr.mxu0 0.0
    %322 = vmatpush2.msra.mxu0 0.0
    %323 = vmatprep.subr.mxu0 0.0
    %324 = vmatpush2.msra.mxu0 0.0
    %325 = vmatprep.subr.mxu0 0.0
    %326 = vmatpush2.msra.mxu0 0.0
    %327 = vmatprep.subr.mxu0 0.0
    %328 = vmatpush2.msra.mxu0 0.0
    %329 = vmatprep.subr.mxu0 0.0
    %330 = vmatpush2.msra.mxu0 0.0
    %331 = vmatprep.subr.mxu0 0.0
    %332 = vmatpush2.msra.mxu0 0.0
    %333 = vmatprep.subr.mxu0 0.0
    %334 = vmatpush2.msra.mxu0 0.0
    %335 = vmatprep.subr.mxu0 0.0
    %336 = vmatpush2.msra.mxu0 0.0
    %337 = vmatprep.mubr.f32.mxu0 0.0
    %338 = vmatmul.mubr.f32.gmra.mxu0 %v241
    %v339 = vpop.f32.mrf.mxu0
    %v340 = vadd.f32 %v271, %v339
    %v341 = vpop.f32.mrf.mxu0
    %342 = vmatprep.mubr.f32.mxu0 0.0
    %343 = vmatmul.mubr.f32.gmra.mxu0 %v243
    %v344 = vpop.f32.mrf.mxu0
    %v345 = vadd.f32 %v271, %v344
    %v346 = vpop.f32.mrf.mxu0
    %347 = vmatprep.mubr.f32.mxu0 0.0
    %348 = vmatmul.mubr.f32.gmra.mxu0 %v245
    %v349 = vpop.f32.mrf.mxu0
    %v350 = vadd.f32 %v271, %v349
    %v351 = vpop.f32.mrf.mxu0
    %352 = vmatprep.mubr.f32.mxu0 0.0
    %353 = vmatmul.mubr.f32.gmra.mxu0 %v247
    %v354 = vpop.f32.mrf.mxu0
    %v355 = vadd.f32 %v271, %v354
    %v356 = vpop.f32.mrf.mxu0
    %357 = vmatprep.mubr.f32.mxu0 0.0
    %358 = vmatmul.mubr.f32.gmra.mxu0 %v249
    %v359 = vpop.f32.mrf.mxu0
    %v360 = vadd.f32 %v271, %v359
    %v361 = vpop.f32.mrf.mxu0
    %362 = vdwg.mxu0
    %v363 = vxor.u32 %v340, 2147483648
    %v364 = vxor.u32 %v345, 2147483648
    %v365 = vxor.u32 %v350, 2147483648
    %v366 = vxor.u32 %v355, 2147483648
    %v367 = vxor.u32 %v360, 2147483648
    %v368 = vmul.f32 %v363, 1.442695
    %v369 = vpow.pop %v368
    %v370 = vmul.f32 %v364, 1.442695
    %v371 = vpow.pop %v370
    %v372 = vmul.f32 %v365, 1.442695
    %v373 = vpow.pop %v372
    %v374 = vmul.f32 %v366, 1.442695
    %v375 = vpow.pop %v374
    %v376 = vmul.f32 %v367, 1.442695
    %v377 = vpow.pop %v376
    %v378 = vadd.f32 %v369, 1.0
    %v379 = vadd.f32 %v371, 1.0
    %v380 = vadd.f32 %v373, 1.0
    %v381 = vadd.f32 %v375, 1.0
    %v382 = vadd.f32 %v377, 1.0
    %v383 = vrcp.pop %v378
    %v384 = vmul.f32 1.0, %v383
    %v385 = vrcp.pop %v379
    %v386 = vmul.f32 1.0, %v385
    %v387 = vrcp.pop %v380
    %v388 = vmul.f32 1.0, %v387
    %v389 = vrcp.pop %v381
    %v390 = vmul.f32 1.0, %v389
    %v391 = vrcp.pop %v382
    %v392 = vmul.f32 1.0, %v391
    %v393 = vld [vmem:[#allocation7] sm:$0xff]
    %v394 = vld [vmem:[#allocation7 + $0x8] sm:$0xff]
    %v395 = vld [vmem:[#allocation7 + $0x10] sm:$0xff]
    %v396 = vld [vmem:[#allocation7 + $0x18] sm:$0xff]
    %v397 = vld [vmem:[#allocation7 + $0x20] sm:$0xff]
    %v398 = vld [vmem:[#allocation7 + $0x28] sm:$0xff]
    %v399 = vld [vmem:[#allocation7 + $0x30] sm:$0xff]
    %v400 = vld [vmem:[#allocation7 + $0x38] sm:$0xff]
    %v401 = vld [vmem:[#allocation7 + $0x40] sm:$0xff]
    %v402 = vld [vmem:[#allocation7 + $0x48] sm:$0xff]
    %v403 = vld [vmem:[#allocation7 + $0x50] sm:$0xff]
    %v404 = vld [vmem:[#allocation7 + $0x58] sm:$0xff]
    %v405 = vld [vmem:[#allocation7 + $0x60] sm:$0xff]
    %v406 = vld [vmem:[#allocation7 + $0x68] sm:$0xff]
    %v407 = vld [vmem:[#allocation7 + $0x70] sm:$0xff]
    %v408 = vld [vmem:[#allocation7 + $0x78] sm:$0xff]
    %v409 = vld [vmem:[%s6] sm:$0x1]
    %v411 = vlaneseq
    %v412 = vshrl.u32 %v411, 7
    %v413 = vsub.s32 0, %v412
    %v414 = vrot.slane %v409, %v413
    %416 = vmatprep.subr.mxu0 0.0
    %417 = vmatpush1.msra.mxu0 %v408
    %418 = vmatprep.subr.mxu0 0.0
    %419 = vmatpush1.msra.mxu0 %v407
    %420 = vmatprep.subr.mxu0 0.0
    %421 = vmatpush1.msra.mxu0 %v406
    %422 = vmatprep.subr.mxu0 0.0
    %423 = vmatpush1.msra.mxu0 %v405
    %424 = vmatprep.subr.mxu0 0.0
    %425 = vmatpush1.msra.mxu0 %v404
    %426 = vmatprep.subr.mxu0 0.0
    %427 = vmatpush1.msra.mxu0 %v403
    %428 = vmatprep.subr.mxu0 0.0
    %429 = vmatpush1.msra.mxu0 %v402
    %430 = vmatprep.subr.mxu0 0.0
    %431 = vmatpush1.msra.mxu0 %v401
    %432 = vmatprep.subr.mxu0 0.0
    %433 = vmatpush1.msra.mxu0 %v400
    %434 = vmatprep.subr.mxu0 0.0
    %435 = vmatpush1.msra.mxu0 %v399
    %436 = vmatprep.subr.mxu0 0.0
    %437 = vmatpush1.msra.mxu0 %v398
    %438 = vmatprep.subr.mxu0 0.0
    %439 = vmatpush1.msra.mxu0 %v397
    %440 = vmatprep.subr.mxu0 0.0
    %441 = vmatpush1.msra.mxu0 %v396
    %442 = vmatprep.subr.mxu0 0.0
    %443 = vmatpush1.msra.mxu0 %v395
    %444 = vmatprep.subr.mxu0 0.0
    %445 = vmatpush1.msra.mxu0 %v394
    %446 = vmatprep.subr.mxu0 0.0
    %447 = vmatpush1.msra.mxu0 %v393
    %448 = vmatprep.subr.mxu0 0.0
    %449 = vmatpush2.msra.mxu0 0.0
    %450 = vmatprep.subr.mxu0 0.0
    %451 = vmatpush2.msra.mxu0 0.0
    %452 = vmatprep.subr.mxu0 0.0
    %453 = vmatpush2.msra.mxu0 0.0
    %454 = vmatprep.subr.mxu0 0.0
    %455 = vmatpush2.msra.mxu0 0.0
    %456 = vmatprep.subr.mxu0 0.0
    %457 = vmatpush2.msra.mxu0 0.0
    %458 = vmatprep.subr.mxu0 0.0
    %459 = vmatpush2.msra.mxu0 0.0
    %460 = vmatprep.subr.mxu0 0.0
    %461 = vmatpush2.msra.mxu0 0.0
    %462 = vmatprep.subr.mxu0 0.0
    %463 = vmatpush2.msra.mxu0 0.0
    %464 = vmatprep.subr.mxu0 0.0
    %465 = vmatpush2.msra.mxu0 0.0
    %466 = vmatprep.subr.mxu0 0.0
    %467 = vmatpush2.msra.mxu0 0.0
    %468 = vmatprep.subr.mxu0 0.0
    %469 = vmatpush2.msra.mxu0 0.0
    %470 = vmatprep.subr.mxu0 0.0
    %471 = vmatpush2.msra.mxu0 0.0
    %472 = vmatprep.subr.mxu0 0.0
    %473 = vmatpush2.msra.mxu0 0.0
    %474 = vmatprep.subr.mxu0 0.0
    %475 = vmatpush2.msra.mxu0 0.0
    %476 = vmatprep.subr.mxu0 0.0
    %477 = vmatpush2.msra.mxu0 0.0
    %478 = vmatprep.subr.mxu0 0.0
    %479 = vmatpush2.msra.mxu0 0.0
    %480 = vmatprep.mubr.f32.mxu0 0.0
    %481 = vmatmul.mubr.f32.gmra.mxu0 %v384
    %v482 = vpop.f32.mrf.mxu0
    %v483 = vadd.f32 %v414, %v482
    %v484 = vpop.f32.mrf.mxu0
    %485 = vmatprep.mubr.f32.mxu0 0.0
    %486 = vmatmul.mubr.f32.gmra.mxu0 %v386
    %v487 = vpop.f32.mrf.mxu0
    %v488 = vadd.f32 %v414, %v487
    %v489 = vpop.f32.mrf.mxu0
    %490 = vmatprep.mubr.f32.mxu0 0.0
    %491 = vmatmul.mubr.f32.gmra.mxu0 %v388
    %v492 = vpop.f32.mrf.mxu0
    %v493 = vadd.f32 %v414, %v492
    %v494 = vpop.f32.mrf.mxu0
    %495 = vmatprep.mubr.f32.mxu0 0.0
    %496 = vmatmul.mubr.f32.gmra.mxu0 %v390
    %v497 = vpop.f32.mrf.mxu0
    %v498 = vadd.f32 %v414, %v497
    %v499 = vpop.f32.mrf.mxu0
    %500 = vmatprep.mubr.f32.mxu0 0.0
    %501 = vmatmul.mubr.f32.gmra.mxu0 %v392
    %v502 = vpop.f32.mrf.mxu0
    %v503 = vadd.f32 %v414, %v502
    %v504 = vpop.f32.mrf.mxu0
    %505 = vdwg.mxu0
    %506 = vst [vmem:[%s7] sm:$0xff] %v483
    %507 = vst [vmem:[%s7 + $0x8] sm:$0xff] %v488
    %508 = vst [vmem:[%s7 + $0x10] sm:$0xff] %v493
    %509 = vst [vmem:[%s7 + $0x18] sm:$0xff] %v498
    %510 = vst [vmem:[%s7 + $0x20] sm:$0xff] %v503
    // Predicated region
    $region46: #{digit_classifier_forward.1} parent=1 // pred_check
      _
    $region47: #{digit_classifier_forward.1} parent=1 // pred_check_branch
      %512 = sbr.rel (0) target = $region49
    $region48: #{digit_classifier_forward.1} parent=1 // pred_region
      _
    $region49: #{digit_classifier_forward.1} parent=1 // pred_fallthru
      _
    // Predicated region
    $region50: #{digit_classifier_forward.1} parent=1 // pred_check
      _
    $region51: #{digit_classifier_forward.1} parent=1 // pred_check_branch
      %514 = sbr.rel (0) target = $region53
    $region52: #{digit_classifier_forward.1} parent=1 // pred_region
      _
    $region53: #{digit_classifier_forward.1} parent=1 // pred_fallthru
      _
    %515 = vsyncpa [#allocation3], 1
    %516 = vsyncpa [#allocation5], 1
    %517 = vsyncpa [#allocation8], 1

</llo_original>
